<compile_context>
chip_gen: v6e
topology: v6e:2x2x1
jax: 0.10.0
libtpu: 0.0.40
codegen_flags: <defaults>
</compile_context>

<pallas_src>
import math
import functools

import jax
import jax.numpy as jnp
from jax import lax
from jax.experimental import pallas as pl
from jax.experimental.pallas import tpu as pltpu


def encoder_kernel(x_ref, wih_ref, whh_ref, b_ref, wh_ref, bh_ref,
                   out_ref, hseq_ref):
    """Whole forward pass: LSTM recurrence (batch row already sliced to 1)
    plus the fused, lane-dense linear-head epilogue.

    x_ref:    (S, I)    time-major input, last batch row only
    wih_ref:  (I, 4H)   transposed input->hidden weights (gate order i,f,g,o)
    whh_ref:  (H, 4H)   transposed hidden->hidden weights
    b_ref:    (1, 4H)   b_ih + b_hh
    wh_ref:   (H, P)    [W_mean^T | W_std^T | 0-pad] fused head weights, P>=128
    bh_ref:   (1, P)    [b_mean   | b_std   | 0-pad]
    out_ref:  (S, P)    lane-dense output: [mean | log_var | 0-pad]
    hseq_ref: (S, H)    scratch holding h_t for every step
    """
    S, _ = x_ref.shape
    H = whh_ref.shape[0]

    whh = whh_ref[...]                                    # (H, 4H)

    # Hoisted input projection with the bias folded in: one MXU push covers
    # every timestep, removing one dot + one broadcast-add from each step.
    gx = (jnp.dot(x_ref[...], wih_ref[...],
                  preferred_element_type=jnp.float32)
          + b_ref[...])                                   # (S, 4H)

    h = jnp.zeros((1, H), jnp.float32)
    c = jnp.zeros((1, H), jnp.float32)

    # Statically unrolled recurrence (S is a small compile-time constant).
    for t in range(S):
        gates = (jnp.dot(h, whh, preferred_element_type=jnp.float32)
                 + gx[t:t + 1, :])                        # (1, 4H)
        sg = jax.nn.sigmoid(gates)                        # whole-vreg EUP
        tg = jnp.tanh(gates)                              # whole-vreg EUP
        i = sg[:, 0 * H:1 * H]
        f = sg[:, 1 * H:2 * H]
        g = tg[:, 2 * H:3 * H]
        o = sg[:, 3 * H:4 * H]
        c = f * c + i * g
        h = o * jnp.tanh(c)
        hseq_ref[pl.ds(t, 1), :] = h                      # off the h->h chain

    # Fused lane-dense epilogue: [mean | log_var | 0-pad] in a single matmul,
    # stored as full-width (unmasked) vector stores.
    out_ref[...] = (jnp.dot(hseq_ref[...], wh_ref[...],
                            preferred_element_type=jnp.float32)
                    + bh_ref[...])


def prepare_params(params, lanes=128):
    """One-time weight preparation (kept out of the per-call hot path)."""
    W_ih, W_hh, b_ih, b_hh, Wm, bm, Ws, bs = params
    H = W_hh.shape[1]
    O = Wm.shape[0]
    n_pad = max(lanes, ((2 * O + lanes - 1) // lanes) * lanes)

    wih_t = jnp.transpose(W_ih)                  # (I, 4H)
    whh_t = jnp.transpose(W_hh)                  # (H, 4H)
    b = (b_ih + b_hh).reshape(1, 4 * H)          # (1, 4H)

    # Fused + lane-padded heads: columns [0:O) = mean, [O:2O) = log_var.
    w_heads = jnp.zeros((H, n_pad), jnp.float32)
    w_heads = w_heads.at[:, :O].set(jnp.transpose(Wm))
    w_heads = w_heads.at[:, O:2 * O].set(jnp.transpose(Ws))
    b_heads = jnp.zeros((1, n_pad), jnp.float32)
    b_heads = b_heads.at[:, :O].set(bm)
    b_heads = b_heads.at[:, O:2 * O].set(bs)
    return wih_t, whh_t, b, w_heads, b_heads


@functools.partial(jax.jit, static_argnames=("output_size",))
def encoder_forward(x, wih_t, whh_t, b, w_heads, b_heads, *, output_size):
    """x: (S, B, I) float32.  Returns (mean, log_var), each (S, output_size)."""
    S, B, _ = x.shape
    H = whh_t.shape[0]
    n_pad = w_heads.shape[1]

    # lstm_out[:, -1, :] only ever consumes the last batch row, and batch rows
    # never interact in the recurrence -> run the LSTM on that row alone.
    x_last = x[:, B - 1, :]                      # (S, I)

    vmem = pl.BlockSpec(memory_space=pltpu.MemorySpace.VMEM)
    out = pl.pallas_call(
        encoder_kernel,
        out_shape=jax.ShapeDtypeStruct((S, n_pad), jnp.float32),
        in_specs=[vmem] * 6,
        out_specs=vmem,
        scratch_shapes=[pltpu.VMEM((S, H), jnp.float32)],
    )(x_last, wih_t, whh_t, b, w_heads, b_heads)

    return out[:, :output_size], out[:, output_size:2 * output_size]


def encoder_reference(x, params):
    """Pure-JAX reference mirroring the PyTorch module (for verification)."""
    W_ih, W_hh, b_ih, b_hh, Wm, bm, Ws, bs = params
    H = W_hh.shape[1]
    S, B, _ = x.shape

    def step(carry, x_t):
        h, c = carry
        gates = x_t @ W_ih.T + b_ih + h @ W_hh.T + b_hh
        i = jax.nn.sigmoid(gates[:, 0 * H:1 * H])
        f = jax.nn.sigmoid(gates[:, 1 * H:2 * H])
        g = jnp.tanh(gates[:, 2 * H:3 * H])
        o = jax.nn.sigmoid(gates[:, 3 * H:4 * H])
        c = f * c + i * g
        h = o * jnp.tanh(c)
        return (h, c), h

    h0 = jnp.zeros((B, H), jnp.float32)
    c0 = jnp.zeros((B, H), jnp.float32)
    _, lstm_out = lax.scan(step, (h0, c0), x)     # (S, B, H)
    out = lstm_out[:, -1, :]                      # (S, H)  -- last batch elem
    return out @ Wm.T + bm, out @ Ws.T + bs


def init_params(key, input_size, hidden_size, output_size):
    ks = jax.random.split(key, 8)
    k_lstm = 1.0 / math.sqrt(hidden_size)
    k_lin = 1.0 / math.sqrt(hidden_size)
    u = functools.partial(jax.random.uniform, dtype=jnp.float32)
    W_ih = u(ks[0], (4 * hidden_size, input_size), minval=-k_lstm, maxval=k_lstm)
    W_hh = u(ks[1], (4 * hidden_size, hidden_size), minval=-k_lstm, maxval=k_lstm)
    b_ih = u(ks[2], (4 * hidden_size,), minval=-k_lstm, maxval=k_lstm)
    b_hh = u(ks[3], (4 * hidden_size,), minval=-k_lstm, maxval=k_lstm)
    Wm = u(ks[4], (output_size, hidden_size), minval=-k_lin, maxval=k_lin)
    bm = u(ks[5], (output_size,), minval=-k_lin, maxval=k_lin)
    Ws = u(ks[6], (output_size, hidden_size), minval=-k_lin, maxval=k_lin)
    bs = u(ks[7], (output_size,), minval=-k_lin, maxval=k_lin)
    return (W_ih, W_hh, b_ih, b_hh, Wm, bm, Ws, bs)


if __name__ == "__main__":
    SEQ, BATCH, INPUT, HIDDEN, OUTPUT = 8, 2, 16, 32, 8

    key = jax.random.PRNGKey(0)
    k_x, k_p = jax.random.split(key)
    x = jax.random.normal(k_x, (SEQ, BATCH, INPUT), dtype=jnp.float32)
    params = init_params(k_p, INPUT, HIDDEN, OUTPUT)

    prep = prepare_params(params)                 # one-time weight prep
    mean, log_var = encoder_forward(x, *prep, output_size=OUTPUT)
    jax.block_until_ready((mean, log_var))

    mean_ref, log_var_ref = encoder_reference(x, params)
    assert mean.shape == (SEQ, OUTPUT) and log_var.shape == (SEQ, OUTPUT)
    assert jnp.allclose(mean, mean_ref, atol=1e-5, rtol=1e-5)
    assert jnp.allclose(log_var, log_var_ref, atol=1e-5, rtol=1e-5)

    print("KERNEL_OK")
</pallas_src>

<mosaic_0001>
module attributes {stable_mosaic.version = 11 : i64} {
  func.func @encoder_kernel(%arg0: memref<8x16xf32, #tpu.memory_space<vmem>>, %arg1: memref<16x128xf32, #tpu.memory_space<vmem>>, %arg2: memref<32x128xf32, #tpu.memory_space<vmem>>, %arg3: memref<1x128xf32, #tpu.memory_space<vmem>>, %arg4: memref<32x128xf32, #tpu.memory_space<vmem>>, %arg5: memref<1x128xf32, #tpu.memory_space<vmem>>, %arg6: memref<8x128xf32, #tpu.memory_space<vmem>>, %arg7: memref<8x32xf32, #tpu.memory_space<vmem>>) attributes {dimension_semantics = [], scalar_prefetch = 0 : i64, scratch_operands = 1 : i64, tpu.core_type = #tpu.core_type<tc>} {
    %c0 = arith.constant 0 : index
    %c0_0 = arith.constant 0 : index
    %0 = vector.load %arg2[%c0, %c0_0] : memref<32x128xf32, #tpu.memory_space<vmem>>, vector<32x128xf32>
    %c0_1 = arith.constant 0 : index
    %c0_2 = arith.constant 0 : index
    %1 = vector.load %arg0[%c0_1, %c0_2] : memref<8x16xf32, #tpu.memory_space<vmem>>, vector<8x16xf32>
    %c0_3 = arith.constant 0 : index
    %c0_4 = arith.constant 0 : index
    %2 = vector.load %arg1[%c0_3, %c0_4] : memref<16x128xf32, #tpu.memory_space<vmem>>, vector<16x128xf32>
    %cst = arith.constant dense<0.000000e+00> : vector<8x128xf32>
    %3 = tpu.matmul %1, %2, %cst {dimension_numbers = #tpu.dot_dimension_numbers<[1], [0], [0], [1], [0, 0, 1, 1], [], []>} : vector<8x16xf32>, vector<16x128xf32>, vector<8x128xf32> -> vector<8x128xf32>
    %c0_5 = arith.constant 0 : index
    %c0_6 = arith.constant 0 : index
    %4 = vector.load %arg3[%c0_5, %c0_6] : memref<1x128xf32, #tpu.memory_space<vmem>>, vector<1x128xf32>
    %5 = vector.broadcast %4 : vector<1x128xf32> to vector<8x128xf32>
    %6 = arith.addf %3, %5 : vector<8x128xf32>
    %cst_7 = arith.constant 0.000000e+00 : f32
    %7 = vector.broadcast %cst_7 : f32 to vector<1x32xf32>
    %cst_8 = arith.constant 0.000000e+00 : f32
    %8 = vector.broadcast %cst_8 : f32 to vector<1x32xf32>
    %cst_9 = arith.constant dense<0.000000e+00> : vector<1x128xf32>
    %9 = tpu.matmul %7, %0, %cst_9 {dimension_numbers = #tpu.dot_dimension_numbers<[1], [0], [0], [1], [0, 0, 1, 1], [], []>} : vector<1x32xf32>, vector<32x128xf32>, vector<1x128xf32> -> vector<1x128xf32>
    %10 = vector.extract_strided_slice %6 {offsets = [0, 0], sizes = [1, 128], strides = [1, 1]} : vector<8x128xf32> to vector<1x128xf32>
    %11 = arith.addf %9, %10 : vector<1x128xf32>
    %12 = arith.negf %11 : vector<1x128xf32>
    %13 = math.exp %12 : vector<1x128xf32>
    %cst_10 = arith.constant 1.000000e+00 : f32
    %14 = vector.broadcast %cst_10 : f32 to vector<1x128xf32>
    %15 = arith.addf %14, %13 : vector<1x128xf32>
    %16 = arith.divf %14, %15 : vector<1x128xf32>
    %17 = math.tanh %11 : vector<1x128xf32>
    %18 = vector.extract_strided_slice %16 {offsets = [0, 0], sizes = [1, 32], strides = [1, 1]} : vector<1x128xf32> to vector<1x32xf32>
    %19 = vector.extract_strided_slice %16 {offsets = [0, 32], sizes = [1, 32], strides = [1, 1]} : vector<1x128xf32> to vector<1x32xf32>
    %20 = vector.extract_strided_slice %17 {offsets = [0, 64], sizes = [1, 32], strides = [1, 1]} : vector<1x128xf32> to vector<1x32xf32>
    %21 = vector.extract_strided_slice %16 {offsets = [0, 96], sizes = [1, 32], strides = [1, 1]} : vector<1x128xf32> to vector<1x32xf32>
    %22 = arith.mulf %19, %8 : vector<1x32xf32>
    %23 = arith.mulf %18, %20 : vector<1x32xf32>
    %24 = arith.addf %22, %23 : vector<1x32xf32>
    %25 = math.tanh %24 : vector<1x32xf32>
    %26 = arith.mulf %21, %25 : vector<1x32xf32>
    %c0_11 = arith.constant 0 : index
    %c0_12 = arith.constant 0 : index
    %27 = vector.load %arg7[%c0_11, %c0_12] : memref<8x32xf32, #tpu.memory_space<vmem>>, vector<1x32xf32>
    tpu.vector_store %arg7[%c0_11, %c0_12], %26 {strides = array<i32>} : memref<8x32xf32, #tpu.memory_space<vmem>>, vector<1x32xf32>,
    %cst_13 = arith.constant dense<0.000000e+00> : vector<1x128xf32>
    %28 = tpu.matmul %26, %0, %cst_13 {dimension_numbers = #tpu.dot_dimension_numbers<[1], [0], [0], [1], [0, 0, 1, 1], [], []>} : vector<1x32xf32>, vector<32x128xf32>, vector<1x128xf32> -> vector<1x128xf32>
    %29 = vector.extract_strided_slice %6 {offsets = [1, 0], sizes = [1, 128], strides = [1, 1]} : vector<8x128xf32> to vector<1x128xf32>
    %30 = arith.addf %28, %29 : vector<1x128xf32>
    %31 = arith.negf %30 : vector<1x128xf32>
    %32 = math.exp %31 : vector<1x128xf32>
    %cst_14 = arith.constant 1.000000e+00 : f32
    %33 = vector.broadcast %cst_14 : f32 to vector<1x128xf32>
    %34 = arith.addf %33, %32 : vector<1x128xf32>
    %35 = arith.divf %33, %34 : vector<1x128xf32>
    %36 = math.tanh %30 : vector<1x128xf32>
    %37 = vector.extract_strided_slice %35 {offsets = [0, 0], sizes = [1, 32], strides = [1, 1]} : vector<1x128xf32> to vector<1x32xf32>
    %38 = vector.extract_strided_slice %35 {offsets = [0, 32], sizes = [1, 32], strides = [1, 1]} : vector<1x128xf32> to vector<1x32xf32>
    %39 = vector.extract_strided_slice %36 {offsets = [0, 64], sizes = [1, 32], strides = [1, 1]} : vector<1x128xf32> to vector<1x32xf32>
    %40 = vector.extract_strided_slice %35 {offsets = [0, 96], sizes = [1, 32], strides = [1, 1]} : vector<1x128xf32> to vector<1x32xf32>
    %41 = arith.mulf %38, %24 : vector<1x32xf32>
    %42 = arith.mulf %37, %39 : vector<1x32xf32>
    %43 = arith.addf %41, %42 : vector<1x32xf32>
    %44 = math.tanh %43 : vector<1x32xf32>
    %45 = arith.mulf %40, %44 : vector<1x32xf32>
    %c1 = arith.constant 1 : index
    %c0_15 = arith.constant 0 : index
    %46 = vector.load %arg7[%c1, %c0_15] : memref<8x32xf32, #tpu.memory_space<vmem>>, vector<1x32xf32>
    tpu.vector_store %arg7[%c1, %c0_15], %45 {strides = array<i32>} : memref<8x32xf32, #tpu.memory_space<vmem>>, vector<1x32xf32>,
    %cst_16 = arith.constant dense<0.000000e+00> : vector<1x128xf32>
    %47 = tpu.matmul %45, %0, %cst_16 {dimension_numbers = #tpu.dot_dimension_numbers<[1], [0], [0], [1], [0, 0, 1, 1], [], []>} : vector<1x32xf32>, vector<32x128xf32>, vector<1x128xf32> -> vector<1x128xf32>
    %48 = vector.extract_strided_slice %6 {offsets = [2, 0], sizes = [1, 128], strides = [1, 1]} : vector<8x128xf32> to vector<1x128xf32>
    %49 = arith.addf %47, %48 : vector<1x128xf32>
    %50 = arith.negf %49 : vector<1x128xf32>
    %51 = math.exp %50 : vector<1x128xf32>
    %cst_17 = arith.constant 1.000000e+00 : f32
    %52 = vector.broadcast %cst_17 : f32 to vector<1x128xf32>
    %53 = arith.addf %52, %51 : vector<1x128xf32>
    %54 = arith.divf %52, %53 : vector<1x128xf32>
    %55 = math.tanh %49 : vector<1x128xf32>
    %56 = vector.extract_strided_slice %54 {offsets = [0, 0], sizes = [1, 32], strides = [1, 1]} : vector<1x128xf32> to vector<1x32xf32>
    %57 = vector.extract_strided_slice %54 {offsets = [0, 32], sizes = [1, 32], strides = [1, 1]} : vector<1x128xf32> to vector<1x32xf32>
    %58 = vector.extract_strided_slice %55 {offsets = [0, 64], sizes = [1, 32], strides = [1, 1]} : vector<1x128xf32> to vector<1x32xf32>
    %59 = vector.extract_strided_slice %54 {offsets = [0, 96], sizes = [1, 32], strides = [1, 1]} : vector<1x128xf32> to vector<1x32xf32>
    %60 = arith.mulf %57, %43 : vector<1x32xf32>
    %61 = arith.mulf %56, %58 : vector<1x32xf32>
    %62 = arith.addf %60, %61 : vector<1x32xf32>
    %63 = math.tanh %62 : vector<1x32xf32>
    %64 = arith.mulf %59, %63 : vector<1x32xf32>
    %c2 = arith.constant 2 : index
    %c0_18 = arith.constant 0 : index
    %65 = vector.load %arg7[%c2, %c0_18] : memref<8x32xf32, #tpu.memory_space<vmem>>, vector<1x32xf32>
    tpu.vector_store %arg7[%c2, %c0_18], %64 {strides = array<i32>} : memref<8x32xf32, #tpu.memory_space<vmem>>, vector<1x32xf32>,
    %cst_19 = arith.constant dense<0.000000e+00> : vector<1x128xf32>
    %66 = tpu.matmul %64, %0, %cst_19 {dimension_numbers = #tpu.dot_dimension_numbers<[1], [0], [0], [1], [0, 0, 1, 1], [], []>} : vector<1x32xf32>, vector<32x128xf32>, vector<1x128xf32> -> vector<1x128xf32>
    %67 = vector.extract_strided_slice %6 {offsets = [3, 0], sizes = [1, 128], strides = [1, 1]} : vector<8x128xf32> to vector<1x128xf32>
    %68 = arith.addf %66, %67 : vector<1x128xf32>
    %69 = arith.negf %68 : vector<1x128xf32>
    %70 = math.exp %69 : vector<1x128xf32>
    %cst_20 = arith.constant 1.000000e+00 : f32
    %71 = vector.broadcast %cst_20 : f32 to vector<1x128xf32>
    %72 = arith.addf %71, %70 : vector<1x128xf32>
    %73 = arith.divf %71, %72 : vector<1x128xf32>
    %74 = math.tanh %68 : vector<1x128xf32>
    %75 = vector.extract_strided_slice %73 {offsets = [0, 0], sizes = [1, 32], strides = [1, 1]} : vector<1x128xf32> to vector<1x32xf32>
    %76 = vector.extract_strided_slice %73 {offsets = [0, 32], sizes = [1, 32], strides = [1, 1]} : vector<1x128xf32> to vector<1x32xf32>
    %77 = vector.extract_strided_slice %74 {offsets = [0, 64], sizes = [1, 32], strides = [1, 1]} : vector<1x128xf32> to vector<1x32xf32>
    %78 = vector.extract_strided_slice %73 {offsets = [0, 96], sizes = [1, 32], strides = [1, 1]} : vector<1x128xf32> to vector<1x32xf32>
    %79 = arith.mulf %76, %62 : vector<1x32xf32>
    %80 = arith.mulf %75, %77 : vector<1x32xf32>
    %81 = arith.addf %79, %80 : vector<1x32xf32>
    %82 = math.tanh %81 : vector<1x32xf32>
    %83 = arith.mulf %78, %82 : vector<1x32xf32>
    %c3 = arith.constant 3 : index
    %c0_21 = arith.constant 0 : index
    %84 = vector.load %arg7[%c3, %c0_21] : memref<8x32xf32, #tpu.memory_space<vmem>>, vector<1x32xf32>
    tpu.vector_store %arg7[%c3, %c0_21], %83 {strides = array<i32>} : memref<8x32xf32, #tpu.memory_space<vmem>>, vector<1x32xf32>,
    %cst_22 = arith.constant dense<0.000000e+00> : vector<1x128xf32>
    %85 = tpu.matmul %83, %0, %cst_22 {dimension_numbers = #tpu.dot_dimension_numbers<[1], [0], [0], [1], [0, 0, 1, 1], [], []>} : vector<1x32xf32>, vector<32x128xf32>, vector<1x128xf32> -> vector<1x128xf32>
    %86 = vector.extract_strided_slice %6 {offsets = [4, 0], sizes = [1, 128], strides = [1, 1]} : vector<8x128xf32> to vector<1x128xf32>
    %87 = arith.addf %85, %86 : vector<1x128xf32>
    %88 = arith.negf %87 : vector<1x128xf32>
    %89 = math.exp %88 : vector<1x128xf32>
    %cst_23 = arith.constant 1.000000e+00 : f32
    %90 = vector.broadcast %cst_23 : f32 to vector<1x128xf32>
    %91 = arith.addf %90, %89 : vector<1x128xf32>
    %92 = arith.divf %90, %91 : vector<1x128xf32>
    %93 = math.tanh %87 : vector<1x128xf32>
    %94 = vector.extract_strided_slice %92 {offsets = [0, 0], sizes = [1, 32], strides = [1, 1]} : vector<1x128xf32> to vector<1x32xf32>
    %95 = vector.extract_strided_slice %92 {offsets = [0, 32], sizes = [1, 32], strides = [1, 1]} : vector<1x128xf32> to vector<1x32xf32>
    %96 = vector.extract_strided_slice %93 {offsets = [0, 64], sizes = [1, 32], strides = [1, 1]} : vector<1x128xf32> to vector<1x32xf32>
    %97 = vector.extract_strided_slice %92 {offsets = [0, 96], sizes = [1, 32], strides = [1, 1]} : vector<1x128xf32> to vector<1x32xf32>
    %98 = arith.mulf %95, %81 : vector<1x32xf32>
    %99 = arith.mulf %94, %96 : vector<1x32xf32>
    %100 = arith.addf %98, %99 : vector<1x32xf32>
    %101 = math.tanh %100 : vector<1x32xf32>
    %102 = arith.mulf %97, %101 : vector<1x32xf32>
    %c4 = arith.constant 4 : index
    %c0_24 = arith.constant 0 : index
    %103 = vector.load %arg7[%c4, %c0_24] : memref<8x32xf32, #tpu.memory_space<vmem>>, vector<1x32xf32>
    tpu.vector_store %arg7[%c4, %c0_24], %102 {strides = array<i32>} : memref<8x32xf32, #tpu.memory_space<vmem>>, vector<1x32xf32>,
    %cst_25 = arith.constant dense<0.000000e+00> : vector<1x128xf32>
    %104 = tpu.matmul %102, %0, %cst_25 {dimension_numbers = #tpu.dot_dimension_numbers<[1], [0], [0], [1], [0, 0, 1, 1], [], []>} : vector<1x32xf32>, vector<32x128xf32>, vector<1x128xf32> -> vector<1x128xf32>
    %105 = vector.extract_strided_slice %6 {offsets = [5, 0], sizes = [1, 128], strides = [1, 1]} : vector<8x128xf32> to vector<1x128xf32>
    %106 = arith.addf %104, %105 : vector<1x128xf32>
    %107 = arith.negf %106 : vector<1x128xf32>
    %108 = math.exp %107 : vector<1x128xf32>
    %cst_26 = arith.constant 1.000000e+00 : f32
    %109 = vector.broadcast %cst_26 : f32 to vector<1x128xf32>
    %110 = arith.addf %109, %108 : vector<1x128xf32>
    %111 = arith.divf %109, %110 : vector<1x128xf32>
    %112 = math.tanh %106 : vector<1x128xf32>
    %113 = vector.extract_strided_slice %111 {offsets = [0, 0], sizes = [1, 32], strides = [1, 1]} : vector<1x128xf32> to vector<1x32xf32>
    %114 = vector.extract_strided_slice %111 {offsets = [0, 32], sizes = [1, 32], strides = [1, 1]} : vector<1x128xf32> to vector<1x32xf32>
    %115 = vector.extract_strided_slice %112 {offsets = [0, 64], sizes = [1, 32], strides = [1, 1]} : vector<1x128xf32> to vector<1x32xf32>
    %116 = vector.extract_strided_slice %111 {offsets = [0, 96], sizes = [1, 32], strides = [1, 1]} : vector<1x128xf32> to vector<1x32xf32>
    %117 = arith.mulf %114, %100 : vector<1x32xf32>
    %118 = arith.mulf %113, %115 : vector<1x32xf32>
    %119 = arith.addf %117, %118 : vector<1x32xf32>
    %120 = math.tanh %119 : vector<1x32xf32>
    %121 = arith.mulf %116, %120 : vector<1x32xf32>
    %c5 = arith.constant 5 : index
    %c0_27 = arith.constant 0 : index
    %122 = vector.load %arg7[%c5, %c0_27] : memref<8x32xf32, #tpu.memory_space<vmem>>, vector<1x32xf32>
    tpu.vector_store %arg7[%c5, %c0_27], %121 {strides = array<i32>} : memref<8x32xf32, #tpu.memory_space<vmem>>, vector<1x32xf32>,
    %cst_28 = arith.constant dense<0.000000e+00> : vector<1x128xf32>
    %123 = tpu.matmul %121, %0, %cst_28 {dimension_numbers = #tpu.dot_dimension_numbers<[1], [0], [0], [1], [0, 0, 1, 1], [], []>} : vector<1x32xf32>, vector<32x128xf32>, vector<1x128xf32> -> vector<1x128xf32>
    %124 = vector.extract_strided_slice %6 {offsets = [6, 0], sizes = [1, 128], strides = [1, 1]} : vector<8x128xf32> to vector<1x128xf32>
    %125 = arith.addf %123, %124 : vector<1x128xf32>
    %126 = arith.negf %125 : vector<1x128xf32>
    %127 = math.exp %126 : vector<1x128xf32>
    %cst_29 = arith.constant 1.000000e+00 : f32
    %128 = vector.broadcast %cst_29 : f32 to vector<1x128xf32>
    %129 = arith.addf %128, %127 : vector<1x128xf32>
    %130 = arith.divf %128, %129 : vector<1x128xf32>
    %131 = math.tanh %125 : vector<1x128xf32>
    %132 = vector.extract_strided_slice %130 {offsets = [0, 0], sizes = [1, 32], strides = [1, 1]} : vector<1x128xf32> to vector<1x32xf32>
    %133 = vector.extract_strided_slice %130 {offsets = [0, 32], sizes = [1, 32], strides = [1, 1]} : vector<1x128xf32> to vector<1x32xf32>
    %134 = vector.extract_strided_slice %131 {offsets = [0, 64], sizes = [1, 32], strides = [1, 1]} : vector<1x128xf32> to vector<1x32xf32>
    %135 = vector.extract_strided_slice %130 {offsets = [0, 96], sizes = [1, 32], strides = [1, 1]} : vector<1x128xf32> to vector<1x32xf32>
    %136 = arith.mulf %133, %119 : vector<1x32xf32>
    %137 = arith.mulf %132, %134 : vector<1x32xf32>
    %138 = arith.addf %136, %137 : vector<1x32xf32>
    %139 = math.tanh %138 : vector<1x32xf32>
    %140 = arith.mulf %135, %139 : vector<1x32xf32>
    %c6 = arith.constant 6 : index
    %c0_30 = arith.constant 0 : index
    %141 = vector.load %arg7[%c6, %c0_30] : memref<8x32xf32, #tpu.memory_space<vmem>>, vector<1x32xf32>
    tpu.vector_store %arg7[%c6, %c0_30], %140 {strides = array<i32>} : memref<8x32xf32, #tpu.memory_space<vmem>>, vector<1x32xf32>,
    %cst_31 = arith.constant dense<0.000000e+00> : vector<1x128xf32>
    %142 = tpu.matmul %140, %0, %cst_31 {dimension_numbers = #tpu.dot_dimension_numbers<[1], [0], [0], [1], [0, 0, 1, 1], [], []>} : vector<1x32xf32>, vector<32x128xf32>, vector<1x128xf32> -> vector<1x128xf32>
    %143 = vector.extract_strided_slice %6 {offsets = [7, 0], sizes = [1, 128], strides = [1, 1]} : vector<8x128xf32> to vector<1x128xf32>
    %144 = arith.addf %142, %143 : vector<1x128xf32>
    %145 = arith.negf %144 : vector<1x128xf32>
    %146 = math.exp %145 : vector<1x128xf32>
    %cst_32 = arith.constant 1.000000e+00 : f32
    %147 = vector.broadcast %cst_32 : f32 to vector<1x128xf32>
    %148 = arith.addf %147, %146 : vector<1x128xf32>
    %149 = arith.divf %147, %148 : vector<1x128xf32>
    %150 = math.tanh %144 : vector<1x128xf32>
    %151 = vector.extract_strided_slice %149 {offsets = [0, 0], sizes = [1, 32], strides = [1, 1]} : vector<1x128xf32> to vector<1x32xf32>
    %152 = vector.extract_strided_slice %149 {offsets = [0, 32], sizes = [1, 32], strides = [1, 1]} : vector<1x128xf32> to vector<1x32xf32>
    %153 = vector.extract_strided_slice %150 {offsets = [0, 64], sizes = [1, 32], strides = [1, 1]} : vector<1x128xf32> to vector<1x32xf32>
    %154 = vector.extract_strided_slice %149 {offsets = [0, 96], sizes = [1, 32], strides = [1, 1]} : vector<1x128xf32> to vector<1x32xf32>
    %155 = arith.mulf %152, %138 : vector<1x32xf32>
    %156 = arith.mulf %151, %153 : vector<1x32xf32>
    %157 = arith.addf %155, %156 : vector<1x32xf32>
    %158 = math.tanh %157 : vector<1x32xf32>
    %159 = arith.mulf %154, %158 : vector<1x32xf32>
    %c7 = arith.constant 7 : index
    %c0_33 = arith.constant 0 : index
    %160 = vector.load %arg7[%c7, %c0_33] : memref<8x32xf32, #tpu.memory_space<vmem>>, vector<1x32xf32>
    tpu.vector_store %arg7[%c7, %c0_33], %159 {strides = array<i32>} : memref<8x32xf32, #tpu.memory_space<vmem>>, vector<1x32xf32>,
    %c0_34 = arith.constant 0 : index
    %c0_35 = arith.constant 0 : index
    %161 = vector.load %arg7[%c0_34, %c0_35] : memref<8x32xf32, #tpu.memory_space<vmem>>, vector<8x32xf32>
    %c0_36 = arith.constant 0 : index
    %c0_37 = arith.constant 0 : index
    %162 = vector.load %arg4[%c0_36, %c0_37] : memref<32x128xf32, #tpu.memory_space<vmem>>, vector<32x128xf32>
    %cst_38 = arith.constant dense<0.000000e+00> : vector<8x128xf32>
    %163 = tpu.matmul %161, %162, %cst_38 {dimension_numbers = #tpu.dot_dimension_numbers<[1], [0], [0], [1], [0, 0, 1, 1], [], []>} : vector<8x32xf32>, vector<32x128xf32>, vector<8x128xf32> -> vector<8x128xf32>
    %c0_39 = arith.constant 0 : index
    %c0_40 = arith.constant 0 : index
    %164 = vector.load %arg5[%c0_39, %c0_40] : memref<1x128xf32, #tpu.memory_space<vmem>>, vector<1x128xf32>
    %165 = vector.broadcast %164 : vector<1x128xf32> to vector<8x128xf32>
    %166 = arith.addf %163, %165 : vector<8x128xf32>
    %c0_41 = arith.constant 0 : index
    %c0_42 = arith.constant 0 : index
    %167 = vector.load %arg6[%c0_41, %c0_42] : memref<8x128xf32, #tpu.memory_space<vmem>>, vector<8x128xf32>
    tpu.vector_store %arg6[%c0_41, %c0_42], %166 {strides = array<i32>} : memref<8x128xf32, #tpu.memory_space<vmem>>, vector<8x128xf32>,
    return
  }
}

</mosaic_0001>

<llo_original>
// kernel: encoder_forward.1
$region0: #{encoder_forward.1}
  #allocation0 [shape = 'u32[]', space=smem, size = 0x4, offset = 0x4, fixed_abs, tag = 'smem constant byte address 0x4 - core index']
  #allocation1 [shape = 'u32[144,128]{1,0:T(1,128)}', space=vmem, size = 0x12000, scoped, tag = 'internal scratch']
  #allocation2 [shape = 'f32[8,32]{1,0:T(8,128)}', space=vmem, size = 0x1000, scoped, tag = 'scratch operand']
  %s0 = inlined_call_operand.vmem [shape: f32[8,16], index: 0, kind: input, shape index: {}]
  %s1 = inlined_call_operand.vmem [shape: f32[16,128], index: 1, kind: input, shape index: {}]
  %s2 = inlined_call_operand.hbm [shape: f32[32,128], index: 2, kind: input, shape index: {}]
  %s3 = inlined_call_operand.vmem [shape: f32[1,128], index: 3, kind: input, shape index: {}]
  %s4 = inlined_call_operand.hbm [shape: f32[32,128], index: 4, kind: input, shape index: {}]
  %s5 = inlined_call_operand.vmem [shape: f32[1,128], index: 5, kind: input, shape index: {}]
  %s6 = inlined_call_operand.vmem [shape: f32[8,128], index: 6, kind: output, shape index: {}]
  %s7 = sld [smem:[#allocation0]]
  $region42: #{encoder_forward.1} parent=0
    _
  %s9 = ssub.s32 1, %s7
  %s10 = scalar_select 0, %s9, %s7
  $region1: #{encoder_forward.1} parent=0
    #allocation3 [shape = 'u8[16384]{0}', space=vmem, size = 0x4000, scoped, tag = 'input window, operand 2, single buffered']
    #allocation4 [shape = 's32[1]{0}', space=sflag, size = 0x4, scoped, tag = 'scoped memory for encoder_forward.1']
    #allocation5 [shape = 'u8[16384]{0}', space=vmem, size = 0x4000, scoped, tag = 'input window, operand 4, single buffered']
    #allocation6 [shape = 's32[1]{0}', space=sflag, size = 0x4, scoped, tag = 'scoped memory for encoder_forward.1']
    %11 = vsyncpa [#allocation4], 0
    %12 = vsyncpa [#allocation6], 0
    // Predicated region
    $region2: #{encoder_forward.1} parent=1 // pred_check
      _
    $region3: #{encoder_forward.1} parent=1 // pred_check_branch
      %14 = sbr.rel (0) target = $region5
    $region4: #{encoder_forward.1} parent=1 // pred_region
      _
    $region5: #{encoder_forward.1} parent=1 // pred_fallthru
      _
    // Predicated region
    $region6: #{encoder_forward.1} parent=1 // pred_check
      _
    $region7: #{encoder_forward.1} parent=1 // pred_check_branch
      %16 = sbr.rel (0) target = $region9
    $region8: #{encoder_forward.1} parent=1 // pred_region
      _
    $region9: #{encoder_forward.1} parent=1 // pred_fallthru
      _
    // Predicated region
    $region10: #{encoder_forward.1} parent=1 // pred_check
      _
    $region11: #{encoder_forward.1} parent=1 // pred_check_branch
      %18 = sbr.rel (0) target = $region13
    $region12: #{encoder_forward.1} parent=1 // pred_region
      %s20 = ssub.s32 512, 512
      %21 = vsyncadd [#allocation4], %s20
      %s22 = sshll.u32 [#allocation3], 4
      %s23 = int_to_ptr.vmem [resolvable:$true] %s22
      %28 = dma.hbm_to_vmem [thread:$0]  %s2, 512, %s23, [#allocation4], 128, 128, 8
    $region13: #{encoder_forward.1} parent=1 // pred_fallthru
      _
    // Predicated region
    $region14: #{encoder_forward.1} parent=1 // pred_check
      _
    $region15: #{encoder_forward.1} parent=1 // pred_check_branch
      %30 = sbr.rel (0) target = $region17
    $region16: #{encoder_forward.1} parent=1 // pred_region
      _
    $region17: #{encoder_forward.1} parent=1 // pred_fallthru
      _
    // Predicated region
    $region18: #{encoder_forward.1} parent=1 // pred_check
      _
    $region19: #{encoder_forward.1} parent=1 // pred_check_branch
      %32 = sbr.rel (0) target = $region21
    $region20: #{encoder_forward.1} parent=1 // pred_region
      %s34 = ssub.s32 512, 512
      %35 = vsyncadd [#allocation6], %s34
      %s36 = sshll.u32 [#allocation5], 4
      %s37 = int_to_ptr.vmem [resolvable:$true] %s36
      %42 = dma.hbm_to_vmem [thread:$0]  %s4, 512, %s37, [#allocation6], 128, 128, 8
    $region21: #{encoder_forward.1} parent=1 // pred_fallthru
      _
    // Predicated region
    $region22: #{encoder_forward.1} parent=1 // pred_check
      _
    $region23: #{encoder_forward.1} parent=1 // pred_check_branch
      %44 = sbr.rel (0) target = $region25
    $region24: #{encoder_forward.1} parent=1 // pred_region
      _
    $region25: #{encoder_forward.1} parent=1 // pred_fallthru
      _
    // Predicated region
    $region26: #{encoder_forward.1} parent=1 // pred_check
      _
    $region27: #{encoder_forward.1} parent=1 // pred_check_branch
      %46 = sbr.rel (0) target = $region29
    $region28: #{encoder_forward.1} parent=1 // pred_region
      %47 = dma.done [#allocation4], 512
    $region29: #{encoder_forward.1} parent=1 // pred_fallthru
      _
    // Predicated region
    $region30: #{encoder_forward.1} parent=1 // pred_check
      _
    $region31: #{encoder_forward.1} parent=1 // pred_check_branch
      %49 = sbr.rel (0) target = $region33
    $region32: #{encoder_forward.1} parent=1 // pred_region
      %50 = dma.done [#allocation6], 512
    $region33: #{encoder_forward.1} parent=1 // pred_fallthru
      _
    %v51 = vld [vmem:[#allocation3] sm:$0xff]
    %v52 = vld [vmem:[#allocation3 + $0x8] sm:$0xff]
    %v53 = vld [vmem:[#allocation3 + $0x10] sm:$0xff]
    %v54 = vld [vmem:[#allocation3 + $0x18] sm:$0xff]
    %v55 = vld [vmem:[%s0] sm:$0xff]
    %v56 = vld [vmem:[%s1] sm:$0xff]
    %v57 = vld [vmem:[%s1 + $0x8] sm:$0xff]
    %v58 = vld [vmem:[%s3] sm:$0x1]
    %v60 = vlaneseq
    %v61 = vshrl.u32 %v60, 7
    %v62 = vsub.s32 0, %v61
    %v63 = vrot.slane %v58, %v62
    %vm65 = vcmask 130048
    %v67 = vsel %vm65, %v55, 0
    %69 = vmatprep.subr.mxu0 0.0
    %70 = vmatpush1.msra.mxu0 0.0
    %71 = vmatprep.subr.mxu0 0.0
    %72 = vmatpush1.msra.mxu0 0.0
    %73 = vmatprep.subr.mxu0 0.0
    %74 = vmatpush1.msra.mxu0 0.0
    %75 = vmatprep.subr.mxu0 0.0
    %76 = vmatpush1.msra.mxu0 0.0
    %77 = vmatprep.subr.mxu0 0.0
    %78 = vmatpush1.msra.mxu0 0.0
    %79 = vmatprep.subr.mxu0 0.0
    %80 = vmatpush1.msra.mxu0 0.0
    %81 = vmatprep.subr.mxu0 0.0
    %82 = vmatpush1.msra.mxu0 0.0
    %83 = vmatprep.subr.mxu0 0.0
    %84 = vmatpush1.msra.mxu0 0.0
    %85 = vmatprep.subr.mxu0 0.0
    %86 = vmatpush1.msra.mxu0 0.0
    %87 = vmatprep.subr.mxu0 0.0
    %88 = vmatpush1.msra.mxu0 0.0
    %89 = vmatprep.subr.mxu0 0.0
    %90 = vmatpush1.msra.mxu0 0.0
    %91 = vmatprep.subr.mxu0 0.0
    %92 = vmatpush1.msra.mxu0 0.0
    %93 = vmatprep.subr.mxu0 0.0
    %94 = vmatpush1.msra.mxu0 0.0
    %95 = vmatprep.subr.mxu0 0.0
    %96 = vmatpush1.msra.mxu0 0.0
    %97 = vmatprep.subr.mxu0 0.0
    %98 = vmatpush1.msra.mxu0 %v57
    %99 = vmatprep.subr.mxu0 0.0
    %100 = vmatpush1.msra.mxu0 %v56
    %101 = vmatprep.subr.mxu0 0.0
    %102 = vmatpush2.msra.mxu0 0.0
    %103 = vmatprep.subr.mxu0 0.0
    %104 = vmatpush2.msra.mxu0 0.0
    %105 = vmatprep.subr.mxu0 0.0
    %106 = vmatpush2.msra.mxu0 0.0
    %107 = vmatprep.subr.mxu0 0.0
    %108 = vmatpush2.msra.mxu0 0.0
    %109 = vmatprep.subr.mxu0 0.0
    %110 = vmatpush2.msra.mxu0 0.0
    %111 = vmatprep.subr.mxu0 0.0
    %112 = vmatpush2.msra.mxu0 0.0
    %113 = vmatprep.subr.mxu0 0.0
    %114 = vmatpush2.msra.mxu0 0.0
    %115 = vmatprep.subr.mxu0 0.0
    %116 = vmatpush2.msra.mxu0 0.0
    %117 = vmatprep.subr.mxu0 0.0
    %118 = vmatpush2.msra.mxu0 0.0
    %119 = vmatprep.subr.mxu0 0.0
    %120 = vmatpush2.msra.mxu0 0.0
    %121 = vmatprep.subr.mxu0 0.0
    %122 = vmatpush2.msra.mxu0 0.0
    %123 = vmatprep.subr.mxu0 0.0
    %124 = vmatpush2.msra.mxu0 0.0
    %125 = vmatprep.subr.mxu0 0.0
    %126 = vmatpush2.msra.mxu0 0.0
    %127 = vmatprep.subr.mxu0 0.0
    %128 = vmatpush2.msra.mxu0 0.0
    %129 = vmatprep.subr.mxu0 0.0
    %130 = vmatpush2.msra.mxu0 0.0
    %131 = vmatprep.subr.mxu0 0.0
    %132 = vmatpush2.msra.mxu0 0.0
    %133 = vmatprep.mubr.f32.mxu0 0.0
    %134 = vmatmul.mubr.f32.gmra.mxu0 %v67
    %v135 = vpop.f32.mrf.mxu0
    %v136 = vadd.f32 %v63, %v135
    %v137 = vpop.f32.mrf.mxu0
    %138 = vdwg.mxu0
    %vm139 = vcmask 261120
    %v141 = vsel %vm139, 0.0, 0
    %143 = vmatprep.subr.mxu0 0.0
    %144 = vmatpush1.msra.mxu0 0.0
    %145 = vmatprep.subr.mxu0 0.0
    %146 = vmatpush1.msra.mxu0 0.0
    %147 = vmatprep.subr.mxu0 0.0
    %148 = vmatpush1.msra.mxu0 0.0
    %149 = vmatprep.subr.mxu0 0.0
    %150 = vmatpush1.msra.mxu0 0.0
    %151 = vmatprep.subr.mxu0 0.0
    %152 = vmatpush1.msra.mxu0 0.0
    %153 = vmatprep.subr.mxu0 0.0
    %154 = vmatpush1.msra.mxu0 0.0
    %155 = vmatprep.subr.mxu0 0.0
    %156 = vmatpush1.msra.mxu0 0.0
    %157 = vmatprep.subr.mxu0 0.0
    %158 = vmatpush1.msra.mxu0 0.0
    %159 = vmatprep.subr.mxu0 0.0
    %160 = vmatpush1.msra.mxu0 0.0
    %161 = vmatprep.subr.mxu0 0.0
    %162 = vmatpush1.msra.mxu0 0.0
    %163 = vmatprep.subr.mxu0 0.0
    %164 = vmatpush1.msra.mxu0 0.0
    %165 = vmatprep.subr.mxu0 0.0
    %166 = vmatpush1.msra.mxu0 0.0
    %167 = vmatprep.subr.mxu0 0.0
    %168 = vmatpush1.msra.mxu0 %v54
    %169 = vmatprep.subr.mxu0 0.0
    %170 = vmatpush1.msra.mxu0 %v53
    %171 = vmatprep.subr.mxu0 0.0
    %172 = vmatpush1.msra.mxu0 %v52
    %173 = vmatprep.subr.mxu0 0.0
    %174 = vmatpush1.msra.mxu0 %v51
    %175 = vmatprep.subr.mxu0 0.0
    %176 = vmatpush2.msra.mxu0 0.0
    %177 = vmatprep.subr.mxu0 0.0
    %178 = vmatpush2.msra.mxu0 0.0
    %179 = vmatprep.subr.mxu0 0.0
    %180 = vmatpush2.msra.mxu0 0.0
    %181 = vmatprep.subr.mxu0 0.0
    %182 = vmatpush2.msra.mxu0 0.0
    %183 = vmatprep.subr.mxu0 0.0
    %184 = vmatpush2.msra.mxu0 0.0
    %185 = vmatprep.subr.mxu0 0.0
    %186 = vmatpush2.msra.mxu0 0.0
    %187 = vmatprep.subr.mxu0 0.0
    %188 = vmatpush2.msra.mxu0 0.0
    %189 = vmatprep.subr.mxu0 0.0
    %190 = vmatpush2.msra.mxu0 0.0
    %191 = vmatprep.subr.mxu0 0.0
    %192 = vmatpush2.msra.mxu0 0.0
    %193 = vmatprep.subr.mxu0 0.0
    %194 = vmatpush2.msra.mxu0 0.0
    %195 = vmatprep.subr.mxu0 0.0
    %196 = vmatpush2.msra.mxu0 0.0
    %197 = vmatprep.subr.mxu0 0.0
    %198 = vmatpush2.msra.mxu0 0.0
    %199 = vmatprep.subr.mxu0 0.0
    %200 = vmatpush2.msra.mxu0 0.0
    %201 = vmatprep.subr.mxu0 0.0
    %202 = vmatpush2.msra.mxu0 0.0
    %203 = vmatprep.subr.mxu0 0.0
    %204 = vmatpush2.msra.mxu0 0.0
    %205 = vmatprep.subr.mxu0 0.0
    %206 = vmatpush2.msra.mxu0 0.0
    %207 = vmatprep.mubr.f32.mxu0 0.0
    %208 = vmatmul.mubr.f32.gmra.mxu0 %v141
    %v209 = vpop.f32.mrf.mxu0
    %v210 = vadd.f32 %v136, %v209
    %v211 = vpop.f32.mrf.mxu0
    %212 = vdwg.mxu0
    %v213 = vxor.u32 %v210, 2147483648
    %v214 = vmul.f32 %v213, 1.442695
    %v215 = vpow.pop %v214
    %v216 = vadd.f32 %v215, 1.0
    %v217 = vrcp.pop %v216
    %v218 = vmul.f32 1.0, %v217
    %v219 = vtanh.pop %v210
    %v220 = vmul.f32 %v218, 0.0
    %222 = vrot.lane.b32.xlu0 %v219, 64
    %v223 = vpop.permute.xlu0 %222
    %v225 = vmul.f32 %v218, %v223
    %227 = vrot.lane.b32.xlu0 %v225, 32
    %v228 = vpop.permute.xlu0 %227
    %v230 = vadd.f32 %v220, %v228
    %v231 = vtanh.pop %v230
    %233 = vrot.lane.b32.xlu0 %v231, 64
    %v234 = vpop.permute.xlu0 %233
    %v236 = vmul.f32 %v218, %v234
    %238 = vrot.lane.b32.xlu0 %v236, 32
    %v239 = vpop.permute.xlu0 %238
    %vm241 = vcmask 253952
    %242 = vst.msk [vmem:[#allocation2] sm:$0x1] %vm241, %v239
    %v244 = vrot.slane %v136, 1
    %v246 = vsel %vm139, %v239, 0
    %248 = vmatprep.subr.mxu0 0.0
    %249 = vmatpush1.msra.mxu0 0.0
    %250 = vmatprep.subr.mxu0 0.0
    %251 = vmatpush1.msra.mxu0 0.0
    %252 = vmatprep.subr.mxu0 0.0
    %253 = vmatpush1.msra.mxu0 0.0
    %254 = vmatprep.subr.mxu0 0.0
    %255 = vmatpush1.msra.mxu0 0.0
    %256 = vmatprep.subr.mxu0 0.0
    %257 = vmatpush1.msra.mxu0 0.0
    %258 = vmatprep.subr.mxu0 0.0
    %259 = vmatpush1.msra.mxu0 0.0
    %260 = vmatprep.subr.mxu0 0.0
    %261 = vmatpush1.msra.mxu0 0.0
    %262 = vmatprep.subr.mxu0 0.0
    %263 = vmatpush1.msra.mxu0 0.0
    %264 = vmatprep.subr.mxu0 0.0
    %265 = vmatpush1.msra.mxu0 0.0
    %266 = vmatprep.subr.mxu0 0.0
    %267 = vmatpush1.msra.mxu0 0.0
    %268 = vmatprep.subr.mxu0 0.0
    %269 = vmatpush1.msra.mxu0 0.0
    %270 = vmatprep.subr.mxu0 0.0
    %271 = vmatpush1.msra.mxu0 0.0
    %272 = vmatprep.subr.mxu0 0.0
    %273 = vmatpush1.msra.mxu0 %v54
    %274 = vmatprep.subr.mxu0 0.0
    %275 = vmatpush1.msra.mxu0 %v53
    %276 = vmatprep.subr.mxu0 0.0
    %277 = vmatpush1.msra.mxu0 %v52
    %278 = vmatprep.subr.mxu0 0.0
    %279 = vmatpush1.msra.mxu0 %v51
    %280 = vmatprep.subr.mxu0 0.0
    %281 = vmatpush2.msra.mxu0 0.0
    %282 = vmatprep.subr.mxu0 0.0
    %283 = vmatpush2.msra.mxu0 0.0
    %284 = vmatprep.subr.mxu0 0.0
    %285 = vmatpush2.msra.mxu0 0.0
    %286 = vmatprep.subr.mxu0 0.0
    %287 = vmatpush2.msra.mxu0 0.0
    %288 = vmatprep.subr.mxu0 0.0
    %289 = vmatpush2.msra.mxu0 0.0
    %290 = vmatprep.subr.mxu0 0.0
    %291 = vmatpush2.msra.mxu0 0.0
    %292 = vmatprep.subr.mxu0 0.0
    %293 = vmatpush2.msra.mxu0 0.0
    %294 = vmatprep.subr.mxu0 0.0
    %295 = vmatpush2.msra.mxu0 0.0
    %296 = vmatprep.subr.mxu0 0.0
    %297 = vmatpush2.msra.mxu0 0.0
    %298 = vmatprep.subr.mxu0 0.0
    %299 = vmatpush2.msra.mxu0 0.0
    %300 = vmatprep.subr.mxu0 0.0
    %301 = vmatpush2.msra.mxu0 0.0
    %302 = vmatprep.subr.mxu0 0.0
    %303 = vmatpush2.msra.mxu0 0.0
    %304 = vmatprep.subr.mxu0 0.0
    %305 = vmatpush2.msra.mxu0 0.0
    %306 = vmatprep.subr.mxu0 0.0
    %307 = vmatpush2.msra.mxu0 0.0
    %308 = vmatprep.subr.mxu0 0.0
    %309 = vmatpush2.msra.mxu0 0.0
    %310 = vmatprep.subr.mxu0 0.0
    %311 = vmatpush2.msra.mxu0 0.0
    %312 = vmatprep.mubr.f32.mxu0 0.0
    %313 = vmatmul.mubr.f32.gmra.mxu0 %v246
    %v314 = vpop.f32.mrf.mxu0
    %v315 = vadd.f32 %v244, %v314
    %v316 = vpop.f32.mrf.mxu0
    %317 = vdwg.mxu0
    %v318 = vxor.u32 %v315, 2147483648
    %v319 = vmul.f32 %v318, 1.442695
    %v320 = vpow.pop %v319
    %v321 = vadd.f32 %v320, 1.0
    %v322 = vrcp.pop %v321
    %v323 = vmul.f32 1.0, %v322
    %v324 = vtanh.pop %v315
    %v325 = vmul.f32 %v323, %v230
    %327 = vrot.lane.b32.xlu0 %v324, 64
    %v328 = vpop.permute.xlu0 %327
    %v330 = vmul.f32 %v323, %v328
    %332 = vrot.lane.b32.xlu0 %v330, 32
    %v333 = vpop.permute.xlu0 %332
    %v335 = vadd.f32 %v325, %v333
    %v336 = vtanh.pop %v335
    %338 = vrot.lane.b32.xlu0 %v336, 64
    %v339 = vpop.permute.xlu0 %338
    %v341 = vmul.f32 %v323, %v339
    %343 = vrot.lane.b32.xlu0 %v341, 32
    %v344 = vpop.permute.xlu0 %343
    %346 = vst.msk [vmem:[#allocation2 + $0x1] sm:$0x1] %vm241, %v344
    %v347 = vrot.slane %v136, 2
    %v349 = vsel %vm139, %v344, 0
    %351 = vmatprep.subr.mxu0 0.0
    %352 = vmatpush1.msra.mxu0 0.0
    %353 = vmatprep.subr.mxu0 0.0
    %354 = vmatpush1.msra.mxu0 0.0
    %355 = vmatprep.subr.mxu0 0.0
    %356 = vmatpush1.msra.mxu0 0.0
    %357 = vmatprep.subr.mxu0 0.0
    %358 = vmatpush1.msra.mxu0 0.0
    %359 = vmatprep.subr.mxu0 0.0
    %360 = vmatpush1.msra.mxu0 0.0
    %361 = vmatprep.subr.mxu0 0.0
    %362 = vmatpush1.msra.mxu0 0.0
    %363 = vmatprep.subr.mxu0 0.0
    %364 = vmatpush1.msra.mxu0 0.0
    %365 = vmatprep.subr.mxu0 0.0
    %366 = vmatpush1.msra.mxu0 0.0
    %367 = vmatprep.subr.mxu0 0.0
    %368 = vmatpush1.msra.mxu0 0.0
    %369 = vmatprep.subr.mxu0 0.0
    %370 = vmatpush1.msra.mxu0 0.0
    %371 = vmatprep.subr.mxu0 0.0
    %372 = vmatpush1.msra.mxu0 0.0
    %373 = vmatprep.subr.mxu0 0.0
    %374 = vmatpush1.msra.mxu0 0.0
    %375 = vmatprep.subr.mxu0 0.0
    %376 = vmatpush1.msra.mxu0 %v54
    %377 = vmatprep.subr.mxu0 0.0
    %378 = vmatpush1.msra.mxu0 %v53
    %379 = vmatprep.subr.mxu0 0.0
    %380 = vmatpush1.msra.mxu0 %v52
    %381 = vmatprep.subr.mxu0 0.0
    %382 = vmatpush1.msra.mxu0 %v51
    %383 = vmatprep.subr.mxu0 0.0
    %384 = vmatpush2.msra.mxu0 0.0
    %385 = vmatprep.subr.mxu0 0.0
    %386 = vmatpush2.msra.mxu0 0.0
    %387 = vmatprep.subr.mxu0 0.0
    %388 = vmatpush2.msra.mxu0 0.0
    %389 = vmatprep.subr.mxu0 0.0
    %390 = vmatpush2.msra.mxu0 0.0
    %391 = vmatprep.subr.mxu0 0.0
    %392 = vmatpush2.msra.mxu0 0.0
    %393 = vmatprep.subr.mxu0 0.0
    %394 = vmatpush2.msra.mxu0 0.0
    %395 = vmatprep.subr.mxu0 0.0
    %396 = vmatpush2.msra.mxu0 0.0
    %397 = vmatprep.subr.mxu0 0.0
    %398 = vmatpush2.msra.mxu0 0.0
    %399 = vmatprep.subr.mxu0 0.0
    %400 = vmatpush2.msra.mxu0 0.0
    %401 = vmatprep.subr.mxu0 0.0
    %402 = vmatpush2.msra.mxu0 0.0
    %403 = vmatprep.subr.mxu0 0.0
    %404 = vmatpush2.msra.mxu0 0.0
    %405 = vmatprep.subr.mxu0 0.0
    %406 = vmatpush2.msra.mxu0 0.0
    %407 = vmatprep.subr.mxu0 0.0
    %408 = vmatpush2.msra.mxu0 0.0
    %409 = vmatprep.subr.mxu0 0.0
    %410 = vmatpush2.msra.mxu0 0.0
    %411 = vmatprep.subr.mxu0 0.0
    %412 = vmatpush2.msra.mxu0 0.0
    %413 = vmatprep.subr.mxu0 0.0
    %414 = vmatpush2.msra.mxu0 0.0
    %415 = vmatprep.mubr.f32.mxu0 0.0
    %416 = vmatmul.mubr.f32.gmra.mxu0 %v349
    %v417 = vpop.f32.mrf.mxu0
    %v418 = vadd.f32 %v347, %v417
    %v419 = vpop.f32.mrf.mxu0
    %420 = vdwg.mxu0
    %v421 = vxor.u32 %v418, 2147483648
    %v422 = vmul.f32 %v421, 1.442695
    %v423 = vpow.pop %v422
    %v424 = vadd.f32 %v423, 1.0
    %v425 = vrcp.pop %v424
    %v426 = vmul.f32 1.0, %v425
    %v427 = vtanh.pop %v418
    %v428 = vmul.f32 %v426, %v335
    %430 = vrot.lane.b32.xlu0 %v427, 64
    %v431 = vpop.permute.xlu0 %430
    %v433 = vmul.f32 %v426, %v431
    %435 = vrot.lane.b32.xlu0 %v433, 32
    %v436 = vpop.permute.xlu0 %435
    %v438 = vadd.f32 %v428, %v436
    %v439 = vtanh.pop %v438
    %441 = vrot.lane.b32.xlu0 %v439, 64
    %v442 = vpop.permute.xlu0 %441
    %v444 = vmul.f32 %v426, %v442
    %446 = vrot.lane.b32.xlu0 %v444, 32
    %v447 = vpop.permute.xlu0 %446
    %449 = vst.msk [vmem:[#allocation2 + $0x2] sm:$0x1] %vm241, %v447
    %v450 = vrot.slane %v136, 3
    %v452 = vsel %vm139, %v447, 0
    %454 = vmatprep.subr.mxu0 0.0
    %455 = vmatpush1.msra.mxu0 0.0
    %456 = vmatprep.subr.mxu0 0.0
    %457 = vmatpush1.msra.mxu0 0.0
    %458 = vmatprep.subr.mxu0 0.0
    %459 = vmatpush1.msra.mxu0 0.0
    %460 = vmatprep.subr.mxu0 0.0
    %461 = vmatpush1.msra.mxu0 0.0
    %462 = vmatprep.subr.mxu0 0.0
    %463 = vmatpush1.msra.mxu0 0.0
    %464 = vmatprep.subr.mxu0 0.0
    %465 = vmatpush1.msra.mxu0 0.0
    %466 = vmatprep.subr.mxu0 0.0
    %467 = vmatpush1.msra.mxu0 0.0
    %468 = vmatprep.subr.mxu0 0.0
    %469 = vmatpush1.msra.mxu0 0.0
    %470 = vmatprep.subr.mxu0 0.0
    %471 = vmatpush1.msra.mxu0 0.0
    %472 = vmatprep.subr.mxu0 0.0
    %473 = vmatpush1.msra.mxu0 0.0
    %474 = vmatprep.subr.mxu0 0.0
    %475 = vmatpush1.msra.mxu0 0.0
    %476 = vmatprep.subr.mxu0 0.0
    %477 = vmatpush1.msra.mxu0 0.0
    %478 = vmatprep.subr.mxu0 0.0
    %479 = vmatpush1.msra.mxu0 %v54
    %480 = vmatprep.subr.mxu0 0.0
    %481 = vmatpush1.msra.mxu0 %v53
    %482 = vmatprep.subr.mxu0 0.0
    %483 = vmatpush1.msra.mxu0 %v52
    %484 = vmatprep.subr.mxu0 0.0
    %485 = vmatpush1.msra.mxu0 %v51
    %486 = vmatprep.subr.mxu0 0.0
    %487 = vmatpush2.msra.mxu0 0.0
    %488 = vmatprep.subr.mxu0 0.0
    %489 = vmatpush2.msra.mxu0 0.0
    %490 = vmatprep.subr.mxu0 0.0
    %491 = vmatpush2.msra.mxu0 0.0
    %492 = vmatprep.subr.mxu0 0.0
    %493 = vmatpush2.msra.mxu0 0.0
    %494 = vmatprep.subr.mxu0 0.0
    %495 = vmatpush2.msra.mxu0 0.0
    %496 = vmatprep.subr.mxu0 0.0
    %497 = vmatpush2.msra.mxu0 0.0
    %498 = vmatprep.subr.mxu0 0.0
    %499 = vmatpush2.msra.mxu0 0.0
    %500 = vmatprep.subr.mxu0 0.0
    %501 = vmatpush2.msra.mxu0 0.0
    %502 = vmatprep.subr.mxu0 0.0
    %503 = vmatpush2.msra.mxu0 0.0
    %504 = vmatprep.subr.mxu0 0.0
    %505 = vmatpush2.msra.mxu0 0.0
    %506 = vmatprep.subr.mxu0 0.0
    %507 = vmatpush2.msra.mxu0 0.0
    %508 = vmatprep.subr.mxu0 0.0
    %509 = vmatpush2.msra.mxu0 0.0
    %510 = vmatprep.subr.mxu0 0.0
    %511 = vmatpush2.msra.mxu0 0.0
    %512 = vmatprep.subr.mxu0 0.0
    %513 = vmatpush2.msra.mxu0 0.0
    %514 = vmatprep.subr.mxu0 0.0
    %515 = vmatpush2.msra.mxu0 0.0
    %516 = vmatprep.subr.mxu0 0.0
    %517 = vmatpush2.msra.mxu0 0.0
    %518 = vmatprep.mubr.f32.mxu0 0.0
    %519 = vmatmul.mubr.f32.gmra.mxu0 %v452
    %v520 = vpop.f32.mrf.mxu0
    %v521 = vadd.f32 %v450, %v520
    %v522 = vpop.f32.mrf.mxu0
    %523 = vdwg.mxu0
    %v524 = vxor.u32 %v521, 2147483648
    %v525 = vmul.f32 %v524, 1.442695
    %v526 = vpow.pop %v525
    %v527 = vadd.f32 %v526, 1.0
    %v528 = vrcp.pop %v527
    %v529 = vmul.f32 1.0, %v528
    %v530 = vtanh.pop %v521
    %v531 = vmul.f32 %v529, %v438
    %533 = vrot.lane.b32.xlu0 %v530, 64
    %v534 = vpop.permute.xlu0 %533
    %v536 = vmul.f32 %v529, %v534
    %538 = vrot.lane.b32.xlu0 %v536, 32
    %v539 = vpop.permute.xlu0 %538
    %v541 = vadd.f32 %v531, %v539
    %v542 = vtanh.pop %v541
    %544 = vrot.lane.b32.xlu0 %v542, 64
    %v545 = vpop.permute.xlu0 %544
    %v547 = vmul.f32 %v529, %v545
    %549 = vrot.lane.b32.xlu0 %v547, 32
    %v550 = vpop.permute.xlu0 %549
    %552 = vst.msk [vmem:[#allocation2 + $0x3] sm:$0x1] %vm241, %v550
    %v553 = vrot.slane %v136, 4
    %v555 = vsel %vm139, %v550, 0
    %557 = vmatprep.subr.mxu0 0.0
    %558 = vmatpush1.msra.mxu0 0.0
    %559 = vmatprep.subr.mxu0 0.0
    %560 = vmatpush1.msra.mxu0 0.0
    %561 = vmatprep.subr.mxu0 0.0
    %562 = vmatpush1.msra.mxu0 0.0
    %563 = vmatprep.subr.mxu0 0.0
    %564 = vmatpush1.msra.mxu0 0.0
    %565 = vmatprep.subr.mxu0 0.0
    %566 = vmatpush1.msra.mxu0 0.0
    %567 = vmatprep.subr.mxu0 0.0
    %568 = vmatpush1.msra.mxu0 0.0
    %569 = vmatprep.subr.mxu0 0.0
    %570 = vmatpush1.msra.mxu0 0.0
    %571 = vmatprep.subr.mxu0 0.0
    %572 = vmatpush1.msra.mxu0 0.0
    %573 = vmatprep.subr.mxu0 0.0
    %574 = vmatpush1.msra.mxu0 0.0
    %575 = vmatprep.subr.mxu0 0.0
    %576 = vmatpush1.msra.mxu0 0.0
    %577 = vmatprep.subr.mxu0 0.0
    %578 = vmatpush1.msra.mxu0 0.0
    %579 = vmatprep.subr.mxu0 0.0
    %580 = vmatpush1.msra.mxu0 0.0
    %581 = vmatprep.subr.mxu0 0.0
    %582 = vmatpush1.msra.mxu0 %v54
    %583 = vmatprep.subr.mxu0 0.0
    %584 = vmatpush1.msra.mxu0 %v53
    %585 = vmatprep.subr.mxu0 0.0
    %586 = vmatpush1.msra.mxu0 %v52
    %587 = vmatprep.subr.mxu0 0.0
    %588 = vmatpush1.msra.mxu0 %v51
    %589 = vmatprep.subr.mxu0 0.0
    %590 = vmatpush2.msra.mxu0 0.0
    %591 = vmatprep.subr.mxu0 0.0
    %592 = vmatpush2.msra.mxu0 0.0
    %593 = vmatprep.subr.mxu0 0.0
    %594 = vmatpush2.msra.mxu0 0.0
    %595 = vmatprep.subr.mxu0 0.0
    %596 = vmatpush2.msra.mxu0 0.0
    %597 = vmatprep.subr.mxu0 0.0
    %598 = vmatpush2.msra.mxu0 0.0
    %599 = vmatprep.subr.mxu0 0.0
    %600 = vmatpush2.msra.mxu0 0.0
    %601 = vmatprep.subr.mxu0 0.0
    %602 = vmatpush2.msra.mxu0 0.0
    %603 = vmatprep.subr.mxu0 0.0
    %604 = vmatpush2.msra.mxu0 0.0
    %605 = vmatprep.subr.mxu0 0.0
    %606 = vmatpush2.msra.mxu0 0.0
    %607 = vmatprep.subr.mxu0 0.0
    %608 = vmatpush2.msra.mxu0 0.0
    %609 = vmatprep.subr.mxu0 0.0
    %610 = vmatpush2.msra.mxu0 0.0
    %611 = vmatprep.subr.mxu0 0.0
    %612 = vmatpush2.msra.mxu0 0.0
    %613 = vmatprep.subr.mxu0 0.0
    %614 = vmatpush2.msra.mxu0 0.0
    %615 = vmatprep.subr.mxu0 0.0
    %616 = vmatpush2.msra.mxu0 0.0
    %617 = vmatprep.subr.mxu0 0.0
    %618 = vmatpush2.msra.mxu0 0.0
    %619 = vmatprep.subr.mxu0 0.0
    %620 = vmatpush2.msra.mxu0 0.0
    %621 = vmatprep.mubr.f32.mxu0 0.0
    %622 = vmatmul.mubr.f32.gmra.mxu0 %v555
    %v623 = vpop.f32.mrf.mxu0
    %v624 = vadd.f32 %v553, %v623
    %v625 = vpop.f32.mrf.mxu0
    %626 = vdwg.mxu0
    %v627 = vxor.u32 %v624, 2147483648
    %v628 = vmul.f32 %v627, 1.442695
    %v629 = vpow.pop %v628
    %v630 = vadd.f32 %v629, 1.0
    %v631 = vrcp.pop %v630
    %v632 = vmul.f32 1.0, %v631
    %v633 = vtanh.pop %v624
    %v634 = vmul.f32 %v632, %v541
    %636 = vrot.lane.b32.xlu0 %v633, 64
    %v637 = vpop.permute.xlu0 %636
    %v639 = vmul.f32 %v632, %v637
    %641 = vrot.lane.b32.xlu0 %v639, 32
    %v642 = vpop.permute.xlu0 %641
    %v644 = vadd.f32 %v634, %v642
    %v645 = vtanh.pop %v644
    %647 = vrot.lane.b32.xlu0 %v645, 64
    %v648 = vpop.permute.xlu0 %647
    %v650 = vmul.f32 %v632, %v648
    %652 = vrot.lane.b32.xlu0 %v650, 32
    %v653 = vpop.permute.xlu0 %652
    %655 = vst.msk [vmem:[#allocation2 + $0x4] sm:$0x1] %vm241, %v653
    %v656 = vrot.slane %v136, 5
    %v658 = vsel %vm139, %v653, 0
    %660 = vmatprep.subr.mxu0 0.0
    %661 = vmatpush1.msra.mxu0 0.0
    %662 = vmatprep.subr.mxu0 0.0
    %663 = vmatpush1.msra.mxu0 0.0
    %664 = vmatprep.subr.mxu0 0.0
    %665 = vmatpush1.msra.mxu0 0.0
    %666 = vmatprep.subr.mxu0 0.0
    %667 = vmatpush1.msra.mxu0 0.0
    %668 = vmatprep.subr.mxu0 0.0
    %669 = vmatpush1.msra.mxu0 0.0
    %670 = vmatprep.subr.mxu0 0.0
    %671 = vmatpush1.msra.mxu0 0.0
    %672 = vmatprep.subr.mxu0 0.0
    %673 = vmatpush1.msra.mxu0 0.0
    %674 = vmatprep.subr.mxu0 0.0
    %675 = vmatpush1.msra.mxu0 0.0
    %676 = vmatprep.subr.mxu0 0.0
    %677 = vmatpush1.msra.mxu0 0.0
    %678 = vmatprep.subr.mxu0 0.0
    %679 = vmatpush1.msra.mxu0 0.0
    %680 = vmatprep.subr.mxu0 0.0
    %681 = vmatpush1.msra.mxu0 0.0
    %682 = vmatprep.subr.mxu0 0.0
    %683 = vmatpush1.msra.mxu0 0.0
    %684 = vmatprep.subr.mxu0 0.0
    %685 = vmatpush1.msra.mxu0 %v54
    %686 = vmatprep.subr.mxu0 0.0
    %687 = vmatpush1.msra.mxu0 %v53
    %688 = vmatprep.subr.mxu0 0.0
    %689 = vmatpush1.msra.mxu0 %v52
    %690 = vmatprep.subr.mxu0 0.0
    %691 = vmatpush1.msra.mxu0 %v51
    %692 = vmatprep.subr.mxu0 0.0
    %693 = vmatpush2.msra.mxu0 0.0
    %694 = vmatprep.subr.mxu0 0.0
    %695 = vmatpush2.msra.mxu0 0.0
    %696 = vmatprep.subr.mxu0 0.0
    %697 = vmatpush2.msra.mxu0 0.0
    %698 = vmatprep.subr.mxu0 0.0
    %699 = vmatpush2.msra.mxu0 0.0
    %700 = vmatprep.subr.mxu0 0.0
    %701 = vmatpush2.msra.mxu0 0.0
    %702 = vmatprep.subr.mxu0 0.0
    %703 = vmatpush2.msra.mxu0 0.0
    %704 = vmatprep.subr.mxu0 0.0
    %705 = vmatpush2.msra.mxu0 0.0
    %706 = vmatprep.subr.mxu0 0.0
    %707 = vmatpush2.msra.mxu0 0.0
    %708 = vmatprep.subr.mxu0 0.0
    %709 = vmatpush2.msra.mxu0 0.0
    %710 = vmatprep.subr.mxu0 0.0
    %711 = vmatpush2.msra.mxu0 0.0
    %712 = vmatprep.subr.mxu0 0.0
    %713 = vmatpush2.msra.mxu0 0.0
    %714 = vmatprep.subr.mxu0 0.0
    %715 = vmatpush2.msra.mxu0 0.0
    %716 = vmatprep.subr.mxu0 0.0
    %717 = vmatpush2.msra.mxu0 0.0
    %718 = vmatprep.subr.mxu0 0.0
    %719 = vmatpush2.msra.mxu0 0.0
    %720 = vmatprep.subr.mxu0 0.0
    %721 = vmatpush2.msra.mxu0 0.0
    %722 = vmatprep.subr.mxu0 0.0
    %723 = vmatpush2.msra.mxu0 0.0
    %724 = vmatprep.mubr.f32.mxu0 0.0
    %725 = vmatmul.mubr.f32.gmra.mxu0 %v658
    %v726 = vpop.f32.mrf.mxu0
    %v727 = vadd.f32 %v656, %v726
    %v728 = vpop.f32.mrf.mxu0
    %729 = vdwg.mxu0
    %v730 = vxor.u32 %v727, 2147483648
    %v731 = vmul.f32 %v730, 1.442695
    %v732 = vpow.pop %v731
    %v733 = vadd.f32 %v732, 1.0
    %v734 = vrcp.pop %v733
    %v735 = vmul.f32 1.0, %v734
    %v736 = vtanh.pop %v727
    %v737 = vmul.f32 %v735, %v644
    %739 = vrot.lane.b32.xlu0 %v736, 64
    %v740 = vpop.permute.xlu0 %739
    %v742 = vmul.f32 %v735, %v740
    %744 = vrot.lane.b32.xlu0 %v742, 32
    %v745 = vpop.permute.xlu0 %744
    %v747 = vadd.f32 %v737, %v745
    %v748 = vtanh.pop %v747
    %750 = vrot.lane.b32.xlu0 %v748, 64
    %v751 = vpop.permute.xlu0 %750
    %v753 = vmul.f32 %v735, %v751
    %755 = vrot.lane.b32.xlu0 %v753, 32
    %v756 = vpop.permute.xlu0 %755
    %758 = vst.msk [vmem:[#allocation2 + $0x5] sm:$0x1] %vm241, %v756
    %v759 = vrot.slane %v136, 6
    %v761 = vsel %vm139, %v756, 0
    %763 = vmatprep.subr.mxu0 0.0
    %764 = vmatpush1.msra.mxu0 0.0
    %765 = vmatprep.subr.mxu0 0.0
    %766 = vmatpush1.msra.mxu0 0.0
    %767 = vmatprep.subr.mxu0 0.0
    %768 = vmatpush1.msra.mxu0 0.0
    %769 = vmatprep.subr.mxu0 0.0
    %770 = vmatpush1.msra.mxu0 0.0
    %771 = vmatprep.subr.mxu0 0.0
    %772 = vmatpush1.msra.mxu0 0.0
    %773 = vmatprep.subr.mxu0 0.0
    %774 = vmatpush1.msra.mxu0 0.0
    %775 = vmatprep.subr.mxu0 0.0
    %776 = vmatpush1.msra.mxu0 0.0
    %777 = vmatprep.subr.mxu0 0.0
    %778 = vmatpush1.msra.mxu0 0.0
    %779 = vmatprep.subr.mxu0 0.0
    %780 = vmatpush1.msra.mxu0 0.0
    %781 = vmatprep.subr.mxu0 0.0
    %782 = vmatpush1.msra.mxu0 0.0
    %783 = vmatprep.subr.mxu0 0.0
    %784 = vmatpush1.msra.mxu0 0.0
    %785 = vmatprep.subr.mxu0 0.0
    %786 = vmatpush1.msra.mxu0 0.0
    %787 = vmatprep.subr.mxu0 0.0
    %788 = vmatpush1.msra.mxu0 %v54
    %789 = vmatprep.subr.mxu0 0.0
    %790 = vmatpush1.msra.mxu0 %v53
    %791 = vmatprep.subr.mxu0 0.0
    %792 = vmatpush1.msra.mxu0 %v52
    %793 = vmatprep.subr.mxu0 0.0
    %794 = vmatpush1.msra.mxu0 %v51
    %795 = vmatprep.subr.mxu0 0.0
    %796 = vmatpush2.msra.mxu0 0.0
    %797 = vmatprep.subr.mxu0 0.0
    %798 = vmatpush2.msra.mxu0 0.0
    %799 = vmatprep.subr.mxu0 0.0
    %800 = vmatpush2.msra.mxu0 0.0
    %801 = vmatprep.subr.mxu0 0.0
    %802 = vmatpush2.msra.mxu0 0.0
    %803 = vmatprep.subr.mxu0 0.0
    %804 = vmatpush2.msra.mxu0 0.0
    %805 = vmatprep.subr.mxu0 0.0
    %806 = vmatpush2.msra.mxu0 0.0
    %807 = vmatprep.subr.mxu0 0.0
    %808 = vmatpush2.msra.mxu0 0.0
    %809 = vmatprep.subr.mxu0 0.0
    %810 = vmatpush2.msra.mxu0 0.0
    %811 = vmatprep.subr.mxu0 0.0
    %812 = vmatpush2.msra.mxu0 0.0
    %813 = vmatprep.subr.mxu0 0.0
    %814 = vmatpush2.msra.mxu0 0.0
    %815 = vmatprep.subr.mxu0 0.0
    %816 = vmatpush2.msra.mxu0 0.0
    %817 = vmatprep.subr.mxu0 0.0
    %818 = vmatpush2.msra.mxu0 0.0
    %819 = vmatprep.subr.mxu0 0.0
    %820 = vmatpush2.msra.mxu0 0.0
    %821 = vmatprep.subr.mxu0 0.0
    %822 = vmatpush2.msra.mxu0 0.0
    %823 = vmatprep.subr.mxu0 0.0
    %824 = vmatpush2.msra.mxu0 0.0
    %825 = vmatprep.subr.mxu0 0.0
    %826 = vmatpush2.msra.mxu0 0.0
    %827 = vmatprep.mubr.f32.mxu0 0.0
    %828 = vmatmul.mubr.f32.gmra.mxu0 %v761
    %v829 = vpop.f32.mrf.mxu0
    %v830 = vadd.f32 %v759, %v829
    %v831 = vpop.f32.mrf.mxu0
    %832 = vdwg.mxu0
    %v833 = vxor.u32 %v830, 2147483648
    %v834 = vmul.f32 %v833, 1.442695
    %v835 = vpow.pop %v834
    %v836 = vadd.f32 %v835, 1.0
    %v837 = vrcp.pop %v836
    %v838 = vmul.f32 1.0, %v837
    %v839 = vtanh.pop %v830
    %v840 = vmul.f32 %v838, %v747
    %842 = vrot.lane.b32.xlu0 %v839, 64
    %v843 = vpop.permute.xlu0 %842
    %v845 = vmul.f32 %v838, %v843
    %847 = vrot.lane.b32.xlu0 %v845, 32
    %v848 = vpop.permute.xlu0 %847
    %v850 = vadd.f32 %v840, %v848
    %v851 = vtanh.pop %v850
    %853 = vrot.lane.b32.xlu0 %v851, 64
    %v854 = vpop.permute.xlu0 %853
    %v856 = vmul.f32 %v838, %v854
    %858 = vrot.lane.b32.xlu0 %v856, 32
    %v859 = vpop.permute.xlu0 %858
    %861 = vst.msk [vmem:[#allocation2 + $0x6] sm:$0x1] %vm241, %v859
    %v862 = vrot.slane %v136, 7
    %v864 = vsel %vm139, %v859, 0
    %866 = vmatprep.subr.mxu0 0.0
    %867 = vmatpush1.msra.mxu0 0.0
    %868 = vmatprep.subr.mxu0 0.0
    %869 = vmatpush1.msra.mxu0 0.0
    %870 = vmatprep.subr.mxu0 0.0
    %871 = vmatpush1.msra.mxu0 0.0
    %872 = vmatprep.subr.mxu0 0.0
    %873 = vmatpush1.msra.mxu0 0.0
    %874 = vmatprep.subr.mxu0 0.0
    %875 = vmatpush1.msra.mxu0 0.0
    %876 = vmatprep.subr.mxu0 0.0
    %877 = vmatpush1.msra.mxu0 0.0
    %878 = vmatprep.subr.mxu0 0.0
    %879 = vmatpush1.msra.mxu0 0.0
    %880 = vmatprep.subr.mxu0 0.0
    %881 = vmatpush1.msra.mxu0 0.0
    %882 = vmatprep.subr.mxu0 0.0
    %883 = vmatpush1.msra.mxu0 0.0
    %884 = vmatprep.subr.mxu0 0.0
    %885 = vmatpush1.msra.mxu0 0.0
    %886 = vmatprep.subr.mxu0 0.0
    %887 = vmatpush1.msra.mxu0 0.0
    %888 = vmatprep.subr.mxu0 0.0
    %889 = vmatpush1.msra.mxu0 0.0
    %890 = vmatprep.subr.mxu0 0.0
    %891 = vmatpush1.msra.mxu0 %v54
    %892 = vmatprep.subr.mxu0 0.0
    %893 = vmatpush1.msra.mxu0 %v53
    %894 = vmatprep.subr.mxu0 0.0
    %895 = vmatpush1.msra.mxu0 %v52
    %896 = vmatprep.subr.mxu0 0.0
    %897 = vmatpush1.msra.mxu0 %v51
    %898 = vmatprep.subr.mxu0 0.0
    %899 = vmatpush2.msra.mxu0 0.0
    %900 = vmatprep.subr.mxu0 0.0
    %901 = vmatpush2.msra.mxu0 0.0
    %902 = vmatprep.subr.mxu0 0.0
    %903 = vmatpush2.msra.mxu0 0.0
    %904 = vmatprep.subr.mxu0 0.0
    %905 = vmatpush2.msra.mxu0 0.0
    %906 = vmatprep.subr.mxu0 0.0
    %907 = vmatpush2.msra.mxu0 0.0
    %908 = vmatprep.subr.mxu0 0.0
    %909 = vmatpush2.msra.mxu0 0.0
    %910 = vmatprep.subr.mxu0 0.0
    %911 = vmatpush2.msra.mxu0 0.0
    %912 = vmatprep.subr.mxu0 0.0
    %913 = vmatpush2.msra.mxu0 0.0
    %914 = vmatprep.subr.mxu0 0.0
    %915 = vmatpush2.msra.mxu0 0.0
    %916 = vmatprep.subr.mxu0 0.0
    %917 = vmatpush2.msra.mxu0 0.0
    %918 = vmatprep.subr.mxu0 0.0
    %919 = vmatpush2.msra.mxu0 0.0
    %920 = vmatprep.subr.mxu0 0.0
    %921 = vmatpush2.msra.mxu0 0.0
    %922 = vmatprep.subr.mxu0 0.0
    %923 = vmatpush2.msra.mxu0 0.0
    %924 = vmatprep.subr.mxu0 0.0
    %925 = vmatpush2.msra.mxu0 0.0
    %926 = vmatprep.subr.mxu0 0.0
    %927 = vmatpush2.msra.mxu0 0.0
    %928 = vmatprep.subr.mxu0 0.0
    %929 = vmatpush2.msra.mxu0 0.0
    %930 = vmatprep.mubr.f32.mxu0 0.0
    %931 = vmatmul.mubr.f32.gmra.mxu0 %v864
    %v932 = vpop.f32.mrf.mxu0
    %v933 = vadd.f32 %v862, %v932
    %v934 = vpop.f32.mrf.mxu0
    %935 = vdwg.mxu0
    %v936 = vxor.u32 %v933, 2147483648
    %v937 = vmul.f32 %v936, 1.442695
    %v938 = vpow.pop %v937
    %v939 = vadd.f32 %v938, 1.0
    %v940 = vrcp.pop %v939
    %v941 = vmul.f32 1.0, %v940
    %v942 = vtanh.pop %v933
    %v943 = vmul.f32 %v941, %v850
    %945 = vrot.lane.b32.xlu0 %v942, 64
    %v946 = vpop.permute.xlu0 %945
    %v948 = vmul.f32 %v941, %v946
    %950 = vrot.lane.b32.xlu0 %v948, 32
    %v951 = vpop.permute.xlu0 %950
    %v953 = vadd.f32 %v943, %v951
    %v954 = vtanh.pop %v953
    %956 = vrot.lane.b32.xlu0 %v954, 64
    %v957 = vpop.permute.xlu0 %956
    %v959 = vmul.f32 %v941, %v957
    %961 = vrot.lane.b32.xlu0 %v959, 32
    %v962 = vpop.permute.xlu0 %961
    %964 = vst.msk [vmem:[#allocation2 + $0x7] sm:$0x1] %vm241, %v962
    %v965 = vld [vmem:[#allocation2] sm:$0xff]
    %v966 = vld [vmem:[#allocation5] sm:$0xff]
    %v967 = vld [vmem:[#allocation5 + $0x8] sm:$0xff]
    %v968 = vld [vmem:[#allocation5 + $0x10] sm:$0xff]
    %v969 = vld [vmem:[#allocation5 + $0x18] sm:$0xff]
    %v970 = vld [vmem:[%s5] sm:$0x1]
    %v972 = vlaneseq
    %v973 = vshrl.u32 %v972, 7
    %v974 = vsub.s32 0, %v973
    %v975 = vrot.slane %v970, %v974
    %v978 = vsel %vm139, %v965, 0
    %980 = vmatprep.subr.mxu0 0.0
    %981 = vmatpush1.msra.mxu0 0.0
    %982 = vmatprep.subr.mxu0 0.0
    %983 = vmatpush1.msra.mxu0 0.0
    %984 = vmatprep.subr.mxu0 0.0
    %985 = vmatpush1.msra.mxu0 0.0
    %986 = vmatprep.subr.mxu0 0.0
    %987 = vmatpush1.msra.mxu0 0.0
    %988 = vmatprep.subr.mxu0 0.0
    %989 = vmatpush1.msra.mxu0 0.0
    %990 = vmatprep.subr.mxu0 0.0
    %991 = vmatpush1.msra.mxu0 0.0
    %992 = vmatprep.subr.mxu0 0.0
    %993 = vmatpush1.msra.mxu0 0.0
    %994 = vmatprep.subr.mxu0 0.0
    %995 = vmatpush1.msra.mxu0 0.0
    %996 = vmatprep.subr.mxu0 0.0
    %997 = vmatpush1.msra.mxu0 0.0
    %998 = vmatprep.subr.mxu0 0.0
    %999 = vmatpush1.msra.mxu0 0.0
    %1000 = vmatprep.subr.mxu0 0.0
    %1001 = vmatpush1.msra.mxu0 0.0
    %1002 = vmatprep.subr.mxu0 0.0
    %1003 = vmatpush1.msra.mxu0 0.0
    %1004 = vmatprep.subr.mxu0 0.0
    %1005 = vmatpush1.msra.mxu0 %v969
    %1006 = vmatprep.subr.mxu0 0.0
    %1007 = vmatpush1.msra.mxu0 %v968
    %1008 = vmatprep.subr.mxu0 0.0
    %1009 = vmatpush1.msra.mxu0 %v967
    %1010 = vmatprep.subr.mxu0 0.0
    %1011 = vmatpush1.msra.mxu0 %v966
    %1012 = vmatprep.subr.mxu0 0.0
    %1013 = vmatpush2.msra.mxu0 0.0
    %1014 = vmatprep.subr.mxu0 0.0
    %1015 = vmatpush2.msra.mxu0 0.0
    %1016 = vmatprep.subr.mxu0 0.0
    %1017 = vmatpush2.msra.mxu0 0.0
    %1018 = vmatprep.subr.mxu0 0.0
    %1019 = vmatpush2.msra.mxu0 0.0
    %1020 = vmatprep.subr.mxu0 0.0
    %1021 = vmatpush2.msra.mxu0 0.0
    %1022 = vmatprep.subr.mxu0 0.0
    %1023 = vmatpush2.msra.mxu0 0.0
    %1024 = vmatprep.subr.mxu0 0.0
    %1025 = vmatpush2.msra.mxu0 0.0
    %1026 = vmatprep.subr.mxu0 0.0
    %1027 = vmatpush2.msra.mxu0 0.0
    %1028 = vmatprep.subr.mxu0 0.0
    %1029 = vmatpush2.msra.mxu0 0.0
    %1030 = vmatprep.subr.mxu0 0.0
    %1031 = vmatpush2.msra.mxu0 0.0
    %1032 = vmatprep.subr.mxu0 0.0
    %1033 = vmatpush2.msra.mxu0 0.0
    %1034 = vmatprep.subr.mxu0 0.0
    %1035 = vmatpush2.msra.mxu0 0.0
    %1036 = vmatprep.subr.mxu0 0.0
    %1037 = vmatpush2.msra.mxu0 0.0
    %1038 = vmatprep.subr.mxu0 0.0
    %1039 = vmatpush2.msra.mxu0 0.0
    %1040 = vmatprep.subr.mxu0 0.0
    %1041 = vmatpush2.msra.mxu0 0.0
    %1042 = vmatprep.subr.mxu0 0.0
    %1043 = vmatpush2.msra.mxu0 0.0
    %1044 = vmatprep.mubr.f32.mxu0 0.0
    %1045 = vmatmul.mubr.f32.gmra.mxu0 %v978
    %v1046 = vpop.f32.mrf.mxu0
    %v1047 = vadd.f32 %v975, %v1046
    %v1048 = vpop.f32.mrf.mxu0
    %1049 = vdwg.mxu0
    %1050 = vst [vmem:[%s6] sm:$0xff] %v1047
    // Predicated region
    $region34: #{encoder_forward.1} parent=1 // pred_check
      _
    $region35: #{encoder_forward.1} parent=1 // pred_check_branch
      %1052 = sbr.rel (0) target = $region37
    $region36: #{encoder_forward.1} parent=1 // pred_region
      _
    $region37: #{encoder_forward.1} parent=1 // pred_fallthru
      _
    // Predicated region
    $region38: #{encoder_forward.1} parent=1 // pred_check
      _
    $region39: #{encoder_forward.1} parent=1 // pred_check_branch
      %1054 = sbr.rel (0) target = $region41
    $region40: #{encoder_forward.1} parent=1 // pred_region
      _
    $region41: #{encoder_forward.1} parent=1 // pred_fallthru
      _
    %1055 = vsyncpa [#allocation4], 1
    %1056 = vsyncpa [#allocation6], 1

</llo_original>
